<compile_context>
chip_gen: v6e
topology: v6e:2x2x1
jax: 0.10.0
libtpu: 0.0.40
codegen_flags: <defaults>
</compile_context>

<pallas_src>
import functools

import jax
import jax.numpy as jnp
from jax import lax
from jax.experimental import pallas as pl
from jax.experimental.pallas import tpu as pltpu


def _dist_maps_kernel(pts_ref, o_ref, *, num_points, norm_radius, spatial_scale,
                      use_disks, row_tile, cols, tanh_bf16):
    """One grid step = one (batch, row-tile) block.

    pts_ref: SMEM (batch, 3*num_points*2) f32 click coords (y, x per click)
    o_ref  : VMEM (1, 3, row_tile, cols) output tile
    """
    b = pl.program_id(0)
    r0 = pl.program_id(1) * row_tile

    # Coordinates generated in-kernel (no input DMAs): narrow (TR,1)/(1,C).
    row_idx = (lax.broadcasted_iota(jnp.int32, (row_tile, 1), 0) + r0
               ).astype(jnp.float32)
    col_idx = lax.broadcasted_iota(jnp.int32, (1, cols), 1).astype(jnp.float32)

    ss = jnp.float32(spatial_scale)
    norm = norm_radius * spatial_scale
    if use_disks:
        # Unnormalized distances, compare against norm^2; invalid -> d = 1e6
        # (matches the reference exactly).
        cs = jnp.float32(1.0)
        invalid_c = jnp.float32(1.0e6)
        r2 = jnp.float32(norm * norm)
    else:
        # Fold the normalization AND the 2x of tanh(2*sqrt(.)) into the narrow
        # per-point scaling: d == 4 * d_normalized, out = tanh(sqrt(d)).
        # Invalid -> d = 4e6 == 4 * 1e6 (matches the reference sentinel).
        cs = jnp.float32(2.0 / norm)
        invalid_c = jnp.float32(4.0e6)

    for g in range(3):                       # three click groups / channels
        base = g * num_points * 2

        def point_d(p, base=base):
            # Scalar (SMEM/sreg) side: coords + invalid handling.
            py = pts_ref[b, base + 2 * p]
            px = pts_ref[b, base + 2 * p + 1]
            invalid = jnp.maximum(py, px) < 0.0
            scale_p = jnp.where(invalid, jnp.float32(0.0), cs)        # scalar
            off = jnp.where(invalid, invalid_c, jnp.float32(0.0))     # scalar
            # Narrow work only; one broadcast add forms the (TR, C) plane.
            dy = (row_idx - py * ss) * scale_p                        # (TR, 1)
            dx = (col_idx - px * ss) * scale_p                        # (1, C)
            return dy * dy + (dx * dx + off)                          # (TR, C)

        if num_points <= 8:
            # Full unroll: running min stays in vregs per chunk.
            d_min = point_d(0)
            for p in range(1, num_points):
                d_min = jnp.minimum(d_min, point_d(p))
        else:
            d_min = point_d(0)
            d_min = lax.fori_loop(
                1, num_points,
                lambda p, m: jnp.minimum(m, point_d(p)),
                d_min, unroll=8)

        if use_disks:
            out = (d_min <= r2).astype(o_ref.dtype)
        else:
            if tanh_bf16:
                # bf16 EUP path (v6e/v7x): tanh output is saturated / in [0,1].
                out = jnp.tanh(jnp.sqrt(d_min.astype(jnp.bfloat16)))
                out = out.astype(o_ref.dtype)
            else:
                out = jnp.tanh(jnp.sqrt(d_min)).astype(o_ref.dtype)
        o_ref[0, g, :, :] = out


def _pick_row_tile(batch, rows, cols, dsize, max_block_bytes=None):
    """Largest VMEM-safe multiple-of-sublane row tile; cdiv grid (partial last
    block allowed). Ensures >= 2 total grid steps when possible."""
    if max_block_bytes is None:
        max_block_bytes = 4 << 20
        try:
            vmem = pltpu.get_tpu_info().vmem_capacity_bytes
            # 128 MiB chips (v5e/v6e): bigger blocks; 64 MiB (v7x): stay modest.
            max_block_bytes = (8 << 20) if vmem >= (100 << 20) else (3 << 20)
        except Exception:
            pass
    sub = 16 if dsize == 2 else 8            # packed sublanes for 16-bit output
    bytes_per_row = 3 * cols * dsize
    max_tr = max(sub, (max_block_bytes // max(bytes_per_row, 1)) // sub * sub)
    tr = min(max_tr, -(-rows // sub) * sub)
    if tr >= rows:
        tr = rows                            # full-extent exemption
    # Keep at least 2 grid steps total (megacore / the two v7x TCs).
    if batch * (-(-rows // tr)) < 2 and rows > sub:
        half = -(-rows // 2)
        tr = min(rows, -(-half // sub) * sub)
    n_tiles = -(-rows // tr)
    return tr, n_tiles


def dist_maps(x, points, *, norm_radius, spatial_scale=1.0, use_disks=False,
              out_dtype=jnp.float32, tanh_bf16=False, max_block_bytes=None):
    """Equivalent of DistMaps(norm_radius, spatial_scale, use_disks).forward(x, points).

    out_dtype / tanh_bf16 are optional bandwidth/EUP optimizations (bf16 output
    and bf16 transcendentals on v6e/v7x); defaults preserve f32 semantics.
    """
    batch = int(x.shape[0])
    rows, cols = int(x.shape[2]), int(x.shape[3])
    num_points = int(points.shape[1]) // 3
    if num_points == 0:
        raise ValueError("DistMaps kernel requires at least one point per group")

    # Only (y, x) are used; drop the click-order column before staging to SMEM.
    pts2 = points[:, :, :2].astype(jnp.float32).reshape(batch, 3 * num_points * 2)

    dsize = jnp.dtype(out_dtype).itemsize
    row_tile, n_row_tiles = _pick_row_tile(batch, rows, cols, dsize,
                                           max_block_bytes)
    block_bytes = 3 * row_tile * cols * dsize
    vmem_limit = int(min(max(2 * block_bytes + (8 << 20), 16 << 20), 56 << 20))

    kernel = functools.partial(
        _dist_maps_kernel, num_points=num_points,
        norm_radius=float(norm_radius), spatial_scale=float(spatial_scale),
        use_disks=use_disks, row_tile=row_tile, cols=cols,
        tanh_bf16=bool(tanh_bf16))

    flops = 3 * batch * 3 * rows * cols * num_points
    transcendentals = 0 if use_disks else 2 * batch * 3 * rows * cols
    bytes_accessed = dsize * batch * 3 * rows * cols + 4 * pts2.size

    out = pl.pallas_call(
        kernel,
        out_shape=jax.ShapeDtypeStruct((batch, 3, rows, cols), out_dtype),
        grid=(batch, n_row_tiles),
        in_specs=[
            pl.BlockSpec(memory_space=pltpu.MemorySpace.SMEM),  # click coords
        ],
        out_specs=pl.BlockSpec((1, 3, row_tile, cols),
                               lambda b, r: (b, 0, r, 0)),
        compiler_params=pltpu.CompilerParams(
            dimension_semantics=("parallel", "parallel"),
            vmem_limit_bytes=vmem_limit),
        cost_estimate=pl.CostEstimate(flops=flops,
                                      transcendentals=transcendentals,
                                      bytes_accessed=bytes_accessed),
    )(pts2)
    return out


def dist_maps_ref(points, batch, rows, cols, norm_radius, spatial_scale, use_disks):
    """Pure-JAX reference mirroring the PyTorch code path (GPU/TPU branch)."""
    num_points = points.shape[1] // 3
    pts = points.reshape(-1, points.shape[2]).astype(jnp.float32)
    pt_xy = pts[:, :2]
    invalid = jnp.max(pt_xy, axis=1) < 0

    row_array = jnp.arange(rows, dtype=jnp.float32)
    col_array = jnp.arange(cols, dtype=jnp.float32)
    coord_rows, coord_cols = jnp.meshgrid(row_array, col_array, indexing="ij")
    coords = jnp.stack((coord_rows, coord_cols), axis=0)[None]
    coords = jnp.repeat(coords, pts.shape[0], axis=0)
    add_xy = (pt_xy * spatial_scale).reshape(pts.shape[0], 2, 1, 1)
    coords = coords - add_xy
    if not use_disks:
        coords = coords / (norm_radius * spatial_scale)
    coords = coords * coords
    d = coords[:, 0] + coords[:, 1]
    d = jnp.where(invalid[:, None, None], 1000000.0, d)
    d = d.reshape(-1, num_points, rows, cols).min(axis=1)
    d = d.reshape(-1, 3, rows, cols)
    if use_disks:
        return (d <= (norm_radius * spatial_scale) ** 2).astype(jnp.float32)
    return jnp.tanh(2.0 * jnp.sqrt(d))


if __name__ == "__main__":
    B, C, H, W = 2, 4, 16, 16
    num_points = 2                      # -> 3 * num_points = 6 clicks per image
    norm_radius = 5.0
    spatial_scale = 1.0
    use_disks = False                   # module default

    key = jax.random.PRNGKey(0)
    kx, kp = jax.random.split(key)
    x = jax.random.normal(kx, (B, C, H, W), dtype=jnp.float32)
    pts = jax.random.uniform(kp, (B, 3 * num_points, 3),
                             dtype=jnp.float32, minval=0.0, maxval=float(H - 1))
    # mark a couple of clicks as invalid (the (-1, -1, -1) convention)
    pts = pts.at[0, 1].set(-1.0)
    pts = pts.at[1, 4].set(-1.0)

    out = dist_maps(x, pts, norm_radius=norm_radius,
                    spatial_scale=spatial_scale, use_disks=use_disks)
    out = jax.block_until_ready(out)

    ref = dist_maps_ref(pts, B, H, W, norm_radius, spatial_scale, use_disks)
    if out.shape != (B, 3, H, W):
        raise AssertionError(f"bad output shape {out.shape}")
    if not jnp.allclose(out, ref, atol=1e-5, rtol=1e-5):
        raise AssertionError("Pallas kernel does not match reference")

    # also sanity-check the disk branch against the reference
    out_d = jax.block_until_ready(
        dist_maps(x, pts, norm_radius=norm_radius,
                  spatial_scale=spatial_scale, use_disks=True))
    ref_d = dist_maps_ref(pts, B, H, W, norm_radius, spatial_scale, True)
    if not jnp.allclose(out_d, ref_d, atol=1e-5, rtol=1e-5):
        raise AssertionError("Pallas kernel (use_disks) does not match reference")

    print("KERNEL_OK")
</pallas_src>

<mosaic_0001>
module attributes {stable_mosaic.version = 11 : i64} {
  func.func @_dist_maps_kernel(%arg0: i32, %arg1: i32, %arg2: memref<2x12xf32, #tpu.memory_space<smem>>, %arg3: memref<1x3x16x16xf32, #tpu.memory_space<vmem>>) attributes {dimension_semantics = [#tpu.dimension_semantics<parallel>, #tpu.dimension_semantics<parallel>], iteration_bounds = array<i64: 2, 1>, scalar_prefetch = 0 : i64, scratch_operands = 0 : i64, tpu.core_type = #tpu.core_type<tc>, window_params = [{transform_indices = @transform_0, window_bounds = array<i64: 2, 12>}, {transform_indices = @transform_1, window_bounds = array<i64: 1, 3, 16, 16>}]} {
    %c16_i32 = arith.constant 16 : i32
    %0 = arith.muli %arg1, %c16_i32 : i32
    %1 = tpu.iota {dimensions = array<i32: 0>} : vector<16x1xi32>
    %2 = vector.broadcast %0 : i32 to vector<16x1xi32>
    %3 = arith.addi %1, %2 : vector<16x1xi32>
    %4 = arith.sitofp %3 : vector<16x1xi32> to vector<16x1xf32>
    %5 = tpu.iota {dimensions = array<i32: 1>} : vector<1x16xi32>
    %6 = arith.sitofp %5 : vector<1x16xi32> to vector<1x16xf32>
    %7 = arith.index_cast %arg0 : i32 to index
    %c0 = arith.constant 0 : index
    %8 = memref.load %arg2[%7, %c0] : memref<2x12xf32, #tpu.memory_space<smem>>
    %9 = arith.index_cast %arg0 : i32 to index
    %c1 = arith.constant 1 : index
    %10 = memref.load %arg2[%9, %c1] : memref<2x12xf32, #tpu.memory_space<smem>>
    %11 = arith.maximumf %8, %10 : f32
    %cst = arith.constant 0.000000e+00 : f32
    %12 = arith.cmpf olt, %11, %cst : f32
    %cst_0 = arith.constant 0.000000e+00 : f32
    %cst_1 = arith.constant 4.000000e-01 : f32
    %13 = arith.select %12, %cst_0, %cst_1 : f32
    %cst_2 = arith.constant 4.000000e+06 : f32
    %cst_3 = arith.constant 0.000000e+00 : f32
    %14 = arith.select %12, %cst_2, %cst_3 : f32
    %cst_4 = arith.constant 1.000000e+00 : f32
    %15 = arith.mulf %8, %cst_4 : f32
    %16 = vector.broadcast %15 : f32 to vector<16x1xf32>
    %17 = arith.subf %4, %16 : vector<16x1xf32>
    %18 = vector.broadcast %13 : f32 to vector<16x1xf32>
    %19 = arith.mulf %17, %18 : vector<16x1xf32>
    %cst_5 = arith.constant 1.000000e+00 : f32
    %20 = arith.mulf %10, %cst_5 : f32
    %21 = vector.broadcast %20 : f32 to vector<1x16xf32>
    %22 = arith.subf %6, %21 : vector<1x16xf32>
    %23 = vector.broadcast %13 : f32 to vector<1x16xf32>
    %24 = arith.mulf %22, %23 : vector<1x16xf32>
    %25 = arith.mulf %19, %19 : vector<16x1xf32>
    %26 = arith.mulf %24, %24 : vector<1x16xf32>
    %27 = vector.broadcast %14 : f32 to vector<1x16xf32>
    %28 = arith.addf %26, %27 : vector<1x16xf32>
    %29 = vector.broadcast %25 : vector<16x1xf32> to vector<16x16xf32>
    %30 = vector.broadcast %28 : vector<1x16xf32> to vector<16x16xf32>
    %31 = arith.addf %29, %30 : vector<16x16xf32>
    %32 = arith.index_cast %arg0 : i32 to index
    %c2 = arith.constant 2 : index
    %33 = memref.load %arg2[%32, %c2] : memref<2x12xf32, #tpu.memory_space<smem>>
    %34 = arith.index_cast %arg0 : i32 to index
    %c3 = arith.constant 3 : index
    %35 = memref.load %arg2[%34, %c3] : memref<2x12xf32, #tpu.memory_space<smem>>
    %36 = arith.maximumf %33, %35 : f32
    %cst_6 = arith.constant 0.000000e+00 : f32
    %37 = arith.cmpf olt, %36, %cst_6 : f32
    %cst_7 = arith.constant 0.000000e+00 : f32
    %cst_8 = arith.constant 4.000000e-01 : f32
    %38 = arith.select %37, %cst_7, %cst_8 : f32
    %cst_9 = arith.constant 4.000000e+06 : f32
    %cst_10 = arith.constant 0.000000e+00 : f32
    %39 = arith.select %37, %cst_9, %cst_10 : f32
    %cst_11 = arith.constant 1.000000e+00 : f32
    %40 = arith.mulf %33, %cst_11 : f32
    %41 = vector.broadcast %40 : f32 to vector<16x1xf32>
    %42 = arith.subf %4, %41 : vector<16x1xf32>
    %43 = vector.broadcast %38 : f32 to vector<16x1xf32>
    %44 = arith.mulf %42, %43 : vector<16x1xf32>
    %cst_12 = arith.constant 1.000000e+00 : f32
    %45 = arith.mulf %35, %cst_12 : f32
    %46 = vector.broadcast %45 : f32 to vector<1x16xf32>
    %47 = arith.subf %6, %46 : vector<1x16xf32>
    %48 = vector.broadcast %38 : f32 to vector<1x16xf32>
    %49 = arith.mulf %47, %48 : vector<1x16xf32>
    %50 = arith.mulf %44, %44 : vector<16x1xf32>
    %51 = arith.mulf %49, %49 : vector<1x16xf32>
    %52 = vector.broadcast %39 : f32 to vector<1x16xf32>
    %53 = arith.addf %51, %52 : vector<1x16xf32>
    %54 = vector.broadcast %50 : vector<16x1xf32> to vector<16x16xf32>
    %55 = vector.broadcast %53 : vector<1x16xf32> to vector<16x16xf32>
    %56 = arith.addf %54, %55 : vector<16x16xf32>
    %57 = arith.minimumf %31, %56 : vector<16x16xf32>
    %58 = math.sqrt %57 : vector<16x16xf32>
    %59 = math.tanh %58 : vector<16x16xf32>
    %c0_13 = arith.constant 0 : index
    %c0_14 = arith.constant 0 : index
    %c0_15 = arith.constant 0 : index
    %c0_16 = arith.constant 0 : index
    %60 = vector.load %arg3[%c0_13, %c0_14, %c0_15, %c0_16] : memref<1x3x16x16xf32, #tpu.memory_space<vmem>>, vector<1x1x16x16xf32>
    %61 = vector.shape_cast %60 : vector<1x1x16x16xf32> to vector<16x16xf32>
    %62 = vector.shape_cast %59 : vector<16x16xf32> to vector<1x1x16x16xf32>
    tpu.vector_store %arg3[%c0_13, %c0_14, %c0_15, %c0_16], %62 {strides = array<i32>} : memref<1x3x16x16xf32, #tpu.memory_space<vmem>>, vector<1x1x16x16xf32>,
    %63 = arith.index_cast %arg0 : i32 to index
    %c4 = arith.constant 4 : index
    %64 = memref.load %arg2[%63, %c4] : memref<2x12xf32, #tpu.memory_space<smem>>
    %65 = arith.index_cast %arg0 : i32 to index
    %c5 = arith.constant 5 : index
    %66 = memref.load %arg2[%65, %c5] : memref<2x12xf32, #tpu.memory_space<smem>>
    %67 = arith.maximumf %64, %66 : f32
    %cst_17 = arith.constant 0.000000e+00 : f32
    %68 = arith.cmpf olt, %67, %cst_17 : f32
    %cst_18 = arith.constant 0.000000e+00 : f32
    %cst_19 = arith.constant 4.000000e-01 : f32
    %69 = arith.select %68, %cst_18, %cst_19 : f32
    %cst_20 = arith.constant 4.000000e+06 : f32
    %cst_21 = arith.constant 0.000000e+00 : f32
    %70 = arith.select %68, %cst_20, %cst_21 : f32
    %cst_22 = arith.constant 1.000000e+00 : f32
    %71 = arith.mulf %64, %cst_22 : f32
    %72 = vector.broadcast %71 : f32 to vector<16x1xf32>
    %73 = arith.subf %4, %72 : vector<16x1xf32>
    %74 = vector.broadcast %69 : f32 to vector<16x1xf32>
    %75 = arith.mulf %73, %74 : vector<16x1xf32>
    %cst_23 = arith.constant 1.000000e+00 : f32
    %76 = arith.mulf %66, %cst_23 : f32
    %77 = vector.broadcast %76 : f32 to vector<1x16xf32>
    %78 = arith.subf %6, %77 : vector<1x16xf32>
    %79 = vector.broadcast %69 : f32 to vector<1x16xf32>
    %80 = arith.mulf %78, %79 : vector<1x16xf32>
    %81 = arith.mulf %75, %75 : vector<16x1xf32>
    %82 = arith.mulf %80, %80 : vector<1x16xf32>
    %83 = vector.broadcast %70 : f32 to vector<1x16xf32>
    %84 = arith.addf %82, %83 : vector<1x16xf32>
    %85 = vector.broadcast %81 : vector<16x1xf32> to vector<16x16xf32>
    %86 = vector.broadcast %84 : vector<1x16xf32> to vector<16x16xf32>
    %87 = arith.addf %85, %86 : vector<16x16xf32>
    %88 = arith.index_cast %arg0 : i32 to index
    %c6 = arith.constant 6 : index
    %89 = memref.load %arg2[%88, %c6] : memref<2x12xf32, #tpu.memory_space<smem>>
    %90 = arith.index_cast %arg0 : i32 to index
    %c7 = arith.constant 7 : index
    %91 = memref.load %arg2[%90, %c7] : memref<2x12xf32, #tpu.memory_space<smem>>
    %92 = arith.maximumf %89, %91 : f32
    %cst_24 = arith.constant 0.000000e+00 : f32
    %93 = arith.cmpf olt, %92, %cst_24 : f32
    %cst_25 = arith.constant 0.000000e+00 : f32
    %cst_26 = arith.constant 4.000000e-01 : f32
    %94 = arith.select %93, %cst_25, %cst_26 : f32
    %cst_27 = arith.constant 4.000000e+06 : f32
    %cst_28 = arith.constant 0.000000e+00 : f32
    %95 = arith.select %93, %cst_27, %cst_28 : f32
    %cst_29 = arith.constant 1.000000e+00 : f32
    %96 = arith.mulf %89, %cst_29 : f32
    %97 = vector.broadcast %96 : f32 to vector<16x1xf32>
    %98 = arith.subf %4, %97 : vector<16x1xf32>
    %99 = vector.broadcast %94 : f32 to vector<16x1xf32>
    %100 = arith.mulf %98, %99 : vector<16x1xf32>
    %cst_30 = arith.constant 1.000000e+00 : f32
    %101 = arith.mulf %91, %cst_30 : f32
    %102 = vector.broadcast %101 : f32 to vector<1x16xf32>
    %103 = arith.subf %6, %102 : vector<1x16xf32>
    %104 = vector.broadcast %94 : f32 to vector<1x16xf32>
    %105 = arith.mulf %103, %104 : vector<1x16xf32>
    %106 = arith.mulf %100, %100 : vector<16x1xf32>
    %107 = arith.mulf %105, %105 : vector<1x16xf32>
    %108 = vector.broadcast %95 : f32 to vector<1x16xf32>
    %109 = arith.addf %107, %108 : vector<1x16xf32>
    %110 = vector.broadcast %106 : vector<16x1xf32> to vector<16x16xf32>
    %111 = vector.broadcast %109 : vector<1x16xf32> to vector<16x16xf32>
    %112 = arith.addf %110, %111 : vector<16x16xf32>
    %113 = arith.minimumf %87, %112 : vector<16x16xf32>
    %114 = math.sqrt %113 : vector<16x16xf32>
    %115 = math.tanh %114 : vector<16x16xf32>
    %c0_31 = arith.constant 0 : index
    %c1_32 = arith.constant 1 : index
    %c0_33 = arith.constant 0 : index
    %c0_34 = arith.constant 0 : index
    %116 = vector.load %arg3[%c0_31, %c1_32, %c0_33, %c0_34] : memref<1x3x16x16xf32, #tpu.memory_space<vmem>>, vector<1x1x16x16xf32>
    %117 = vector.shape_cast %116 : vector<1x1x16x16xf32> to vector<16x16xf32>
    %118 = vector.shape_cast %115 : vector<16x16xf32> to vector<1x1x16x16xf32>
    tpu.vector_store %arg3[%c0_31, %c1_32, %c0_33, %c0_34], %118 {strides = array<i32>} : memref<1x3x16x16xf32, #tpu.memory_space<vmem>>, vector<1x1x16x16xf32>,
    %119 = arith.index_cast %arg0 : i32 to index
    %c8 = arith.constant 8 : index
    %120 = memref.load %arg2[%119, %c8] : memref<2x12xf32, #tpu.memory_space<smem>>
    %121 = arith.index_cast %arg0 : i32 to index
    %c9 = arith.constant 9 : index
    %122 = memref.load %arg2[%121, %c9] : memref<2x12xf32, #tpu.memory_space<smem>>
    %123 = arith.maximumf %120, %122 : f32
    %cst_35 = arith.constant 0.000000e+00 : f32
    %124 = arith.cmpf olt, %123, %cst_35 : f32
    %cst_36 = arith.constant 0.000000e+00 : f32
    %cst_37 = arith.constant 4.000000e-01 : f32
    %125 = arith.select %124, %cst_36, %cst_37 : f32
    %cst_38 = arith.constant 4.000000e+06 : f32
    %cst_39 = arith.constant 0.000000e+00 : f32
    %126 = arith.select %124, %cst_38, %cst_39 : f32
    %cst_40 = arith.constant 1.000000e+00 : f32
    %127 = arith.mulf %120, %cst_40 : f32
    %128 = vector.broadcast %127 : f32 to vector<16x1xf32>
    %129 = arith.subf %4, %128 : vector<16x1xf32>
    %130 = vector.broadcast %125 : f32 to vector<16x1xf32>
    %131 = arith.mulf %129, %130 : vector<16x1xf32>
    %cst_41 = arith.constant 1.000000e+00 : f32
    %132 = arith.mulf %122, %cst_41 : f32
    %133 = vector.broadcast %132 : f32 to vector<1x16xf32>
    %134 = arith.subf %6, %133 : vector<1x16xf32>
    %135 = vector.broadcast %125 : f32 to vector<1x16xf32>
    %136 = arith.mulf %134, %135 : vector<1x16xf32>
    %137 = arith.mulf %131, %131 : vector<16x1xf32>
    %138 = arith.mulf %136, %136 : vector<1x16xf32>
    %139 = vector.broadcast %126 : f32 to vector<1x16xf32>
    %140 = arith.addf %138, %139 : vector<1x16xf32>
    %141 = vector.broadcast %137 : vector<16x1xf32> to vector<16x16xf32>
    %142 = vector.broadcast %140 : vector<1x16xf32> to vector<16x16xf32>
    %143 = arith.addf %141, %142 : vector<16x16xf32>
    %144 = arith.index_cast %arg0 : i32 to index
    %c10 = arith.constant 10 : index
    %145 = memref.load %arg2[%144, %c10] : memref<2x12xf32, #tpu.memory_space<smem>>
    %146 = arith.index_cast %arg0 : i32 to index
    %c11 = arith.constant 11 : index
    %147 = memref.load %arg2[%146, %c11] : memref<2x12xf32, #tpu.memory_space<smem>>
    %148 = arith.maximumf %145, %147 : f32
    %cst_42 = arith.constant 0.000000e+00 : f32
    %149 = arith.cmpf olt, %148, %cst_42 : f32
    %cst_43 = arith.constant 0.000000e+00 : f32
    %cst_44 = arith.constant 4.000000e-01 : f32
    %150 = arith.select %149, %cst_43, %cst_44 : f32
    %cst_45 = arith.constant 4.000000e+06 : f32
    %cst_46 = arith.constant 0.000000e+00 : f32
    %151 = arith.select %149, %cst_45, %cst_46 : f32
    %cst_47 = arith.constant 1.000000e+00 : f32
    %152 = arith.mulf %145, %cst_47 : f32
    %153 = vector.broadcast %152 : f32 to vector<16x1xf32>
    %154 = arith.subf %4, %153 : vector<16x1xf32>
    %155 = vector.broadcast %150 : f32 to vector<16x1xf32>
    %156 = arith.mulf %154, %155 : vector<16x1xf32>
    %cst_48 = arith.constant 1.000000e+00 : f32
    %157 = arith.mulf %147, %cst_48 : f32
    %158 = vector.broadcast %157 : f32 to vector<1x16xf32>
    %159 = arith.subf %6, %158 : vector<1x16xf32>
    %160 = vector.broadcast %150 : f32 to vector<1x16xf32>
    %161 = arith.mulf %159, %160 : vector<1x16xf32>
    %162 = arith.mulf %156, %156 : vector<16x1xf32>
    %163 = arith.mulf %161, %161 : vector<1x16xf32>
    %164 = vector.broadcast %151 : f32 to vector<1x16xf32>
    %165 = arith.addf %163, %164 : vector<1x16xf32>
    %166 = vector.broadcast %162 : vector<16x1xf32> to vector<16x16xf32>
    %167 = vector.broadcast %165 : vector<1x16xf32> to vector<16x16xf32>
    %168 = arith.addf %166, %167 : vector<16x16xf32>
    %169 = arith.minimumf %143, %168 : vector<16x16xf32>
    %170 = math.sqrt %169 : vector<16x16xf32>
    %171 = math.tanh %170 : vector<16x16xf32>
    %c0_49 = arith.constant 0 : index
    %c2_50 = arith.constant 2 : index
    %c0_51 = arith.constant 0 : index
    %c0_52 = arith.constant 0 : index
    %172 = vector.load %arg3[%c0_49, %c2_50, %c0_51, %c0_52] : memref<1x3x16x16xf32, #tpu.memory_space<vmem>>, vector<1x1x16x16xf32>
    %173 = vector.shape_cast %172 : vector<1x1x16x16xf32> to vector<16x16xf32>
    %174 = vector.shape_cast %171 : vector<16x16xf32> to vector<1x1x16x16xf32>
    tpu.vector_store %arg3[%c0_49, %c2_50, %c0_51, %c0_52], %174 {strides = array<i32>} : memref<1x3x16x16xf32, #tpu.memory_space<vmem>>, vector<1x1x16x16xf32>,
    return
  }
  func.func @transform_0(%arg0: i32, %arg1: i32) -> (i32, i32) {
    %c0_i32 = arith.constant 0 : i32
    %c0_i32_0 = arith.constant 0 : i32
    %c0_i32_1 = arith.constant 0 : i32
    return %c0_i32, %c0_i32_0 : i32, i32
  }
  func.func @transform_1(%arg0: i32, %arg1: i32) -> (i32, i32, i32, i32) {
    %c0_i32 = arith.constant 0 : i32
    %c0_i32_0 = arith.constant 0 : i32
    %c0_i32_1 = arith.constant 0 : i32
    return %arg0, %c0_i32, %arg1, %c0_i32_0 : i32, i32, i32, i32
  }
}

</mosaic_0001>

<llo_original>
// kernel: tpu_custom_call.1
$region0: #{tpu_custom_call.1}
  #allocation0 [shape = 'u32[]', space=smem, size = 0x4, offset = 0x4, fixed_abs, tag = 'smem constant byte address 0x4 - core index']
  #allocation1 [shape = 'u32[144,128]{1,0:T(1,128)}', space=vmem, size = 0x12000, scoped, tag = 'internal scratch']
  %s0 = inlined_call_operand.hbm [shape: f32[2,12], index: 0, kind: input, shape index: {}]
  %s1 = inlined_call_operand.hbm [shape: f32[2,3,16,16], index: 1, kind: output, shape index: {}]
  %s2 = sld [smem:[#allocation0]]
  $region41: #{tpu_custom_call.1} parent=0
    _
  %s4 = ssub.s32 1, %s2
  %s5 = scalar_select 0, %s4, %s2
  $region1: #{tpu_custom_call.1} parent=0
    #allocation2 [shape = 'u8[1024]{0}', space=smem, size = 0x400, scoped, tag = 'input window, operand 0, single buffered']
    #allocation3 [shape = 's32[2]{0}', space=sflag, size = 0x8, scoped, tag = 'scoped memory for tpu_custom_call.1']
    #allocation4 [shape = 's32[2]{0}', space=sflag, size = 0x8, scoped, tag = 'scoped memory for tpu_custom_call.1']
    #allocation5 [shape = 'u8[49152]{0}', space=vmem, size = 0xc000, scoped, tag = 'output window, operand 0']
    %6 = vsyncpa [#allocation4], 0
    %7 = vsyncpa [#allocation3], 0
    %s8 = scalar_lea.sflag [#allocation3], 1
    %9 = vsyncpa %s8, 0
    loop: start=0, step=1, limit=4
    $region2: #{tpu_custom_call.1} parent=1 // loop_pre_header
      _
    $region3: #{tpu_custom_call.1} parent=1 // loop_header
      %s11 = sphi 0, %s15
      %p12 = scmp.ge.s32.totalorder %s11, 4
      %s18 = sphi 0, %s30
      %s19 = sphi 0, %s26
      %s20 = sphi 0, %s18
      %s21 = sphi 0, %s19
      %s22 = sphi 0, %s20
      %s23 = sphi 0, %s21
      %s31 = sphi 0, %s31
      %s33 = sphi 0, %s31
      %s34 = sphi 0, %s33
      %s48 = sphi 0, %s34
      %s56 = sphi 0, %s58
      %s59 = sphi 0, %s56
      %s60 = sphi 0, %s59
      %s76 = sphi 0, %s60
    $region4: #{tpu_custom_call.1} parent=1 // loop_header_branch
      %14 = sbr.rel (%p12) target = $region8
    $region5: #{tpu_custom_call.1} parent=1 // loop_body
      %s16 = ssub.s32 %s11, 1
      %s17 = ssub.s32 %s11, 2
      %s24 = sadd.s32 1, %s19
      %p25 = scmp.ge.s32.totalorder %s24, 1
      %s26 = scalar_select %p25, 0, %s24
      %s27 = sadd.s32 1, %s18
      %s28 = scalar_select %p25, %s27, %s18
      %p29 = scmp.ge.s32.totalorder %s28, 2
      %s30 = scalar_select %p29, 0, %s28
      %s32 = sadd.s32 %s31, 1
      %p35 = scmp.eq.s32.totalorder %s11, 1
      %p36 = scmp.ne.s32.totalorder %s31, %s33
      %p37 = scmp.eq.s32.totalorder %s11, 0
      %p38 = por %p36, %p37
      %p39 = scmp.ne.s32.totalorder %s31, %s33
      %p40 = scmp.eq.s32.totalorder %s16, 1
      %p41 = por %p39, %p40
      %p42 = scmp.ne.s32.totalorder %s33, %s34
      %p43 = scmp.eq.s32.totalorder %s16, 0
      %p44 = por %p42, %p43
      %p45 = scmp.ne.s32.totalorder %s33, %s34
      %p46 = scmp.eq.s32.totalorder %s17, 1
      %p47 = por %p45, %p46
      %p49 = scmp.ne.s32.totalorder %s34, %s48
      %p50 = scmp.eq.s32.totalorder %s17, 0
      %p51 = por %p49, %p50
      %s52 = ssub.s32 %s18, %s30
      %s53 = ssub.s32 %s19, %s26
      %s54 = sor.u32 %s52, %s53
      %p55 = scmp.eq.s32.totalorder %s54, 0
      %s57 = sadd.s32 %s56, 1
      %s58 = scalar_select %p55, %s56, %s57
      %p61 = pneg %p55
      %p62 = scmp.eq.s32.totalorder %s11, 1
      %p63 = por %p61, %p62
      %p64 = scmp.ne.s32.totalorder %s56, %s59
      %p65 = scmp.eq.s32.totalorder %s11, 0
      %p66 = por %p64, %p65
      %p67 = scmp.ne.s32.totalorder %s56, %s59
      %p68 = scmp.eq.s32.totalorder %s16, 1
      %p69 = por %p67, %p68
      %p70 = scmp.ne.s32.totalorder %s59, %s60
      %p71 = scmp.eq.s32.totalorder %s16, 0
      %p72 = por %p70, %p71
      %p73 = scmp.ne.s32.totalorder %s59, %s60
      %p74 = scmp.eq.s32.totalorder %s17, 1
      %p75 = por %p73, %p74
      %p77 = scmp.ne.s32.totalorder %s60, %s76
      %p78 = scmp.eq.s32.totalorder %s17, 0
      %p79 = por %p77, %p78
      %p80 = scmp.le.s32.totalorder 1, %s11
      %p81 = scmp.lt.s32.totalorder %s11, 3
      %p82 = pnand %p80, %p81
      %p83 = pneg %p82
      // Predicated region
      $region9: #{tpu_custom_call.1} parent=5 // pred_check
        _
      $region10: #{tpu_custom_call.1} parent=5 // pred_check_branch
        %85 = sbr.rel (%p82) target = $region12
      $region11: #{tpu_custom_call.1} parent=5 // pred_region
        %s86 = ssub.s32 %s11, 1
        // Predicated region
        $region13: #{tpu_custom_call.1} parent=11 // pred_check
          %p87 = pneg %p44
        $region14: #{tpu_custom_call.1} parent=11 // pred_check_branch
          %89 = sbr.rel (%p87) target = $region16
        $region15: #{tpu_custom_call.1} parent=11 // pred_region
          %s91 = ssub.s32 32, 32
          %92 = vsyncadd [#allocation4], %s91
          %95 = dma.hbm_to_smem %s0, 32, [#allocation2], [#allocation4]
        $region16: #{tpu_custom_call.1} parent=11 // pred_fallthru
          _
      $region12: #{tpu_custom_call.1} parent=5 // pred_fallthru
        _
      %p96 = scmp.lt.s32.totalorder %s11, 2
      // Predicated region
      $region17: #{tpu_custom_call.1} parent=5 // pred_check
        %p97 = pneg %p96
      $region18: #{tpu_custom_call.1} parent=5 // pred_check_branch
        %99 = sbr.rel (%p97) target = $region20
      $region19: #{tpu_custom_call.1} parent=5 // pred_region
        _
      $region20: #{tpu_custom_call.1} parent=5 // pred_fallthru
        _
      %p100 = scmp.le.s32.totalorder 1, %s11
      %p101 = scmp.lt.s32.totalorder %s11, 3
      %p102 = pnand %p100, %p101
      %p103 = pneg %p102
      // Predicated region
      $region21: #{tpu_custom_call.1} parent=5 // pred_check
        _
      $region22: #{tpu_custom_call.1} parent=5 // pred_check_branch
        %105 = sbr.rel (%p102) target = $region24
      $region23: #{tpu_custom_call.1} parent=5 // pred_region
        %s106 = ssub.s32 %s11, 1
        // Predicated region
        $region25: #{tpu_custom_call.1} parent=23 // pred_check
          %p107 = pneg %p44
        $region26: #{tpu_custom_call.1} parent=23 // pred_check_branch
          %109 = sbr.rel (%p107) target = $region28
        $region27: #{tpu_custom_call.1} parent=23 // pred_region
          %110 = dma.done [#allocation4], 32
        $region28: #{tpu_custom_call.1} parent=23 // pred_fallthru
          _
        %111 = sfence
        %p112 = pneg %p44
        %p113 = pneg %p41
        %p114 = pneg %p72
        %p115 = pneg %p69
        %s116 = sand.u32 %s59, 1
        %s117 = scalar_lea.sflag [#allocation3], %s116
        %s118 = sand.u32 %s59, 1
        %s119 = smul.addr %s118, 48
        %s120 = scalar_lea.vmem [#allocation5], %s119
        %s121 = smul.u32 2, %s21
        %s122 = smul.u32 %s21, 16
        %v123 = vlaneseq
        %v124 = vshrl.u32 %v123, 7
        %v125 = vadd.s32 %v124, 8
        %v126 = vstv %s122
        %v127 = vadd.s32 %v124, %v126
        %v128 = vadd.s32 %v125, %v126
        %v129 = vcvt.s32.f32 %v127
        %v130 = vcvt.s32.f32 %v128
        %v131 = vlaneseq
        %v132 = vand.u32 %v131, 127
        %v133 = vcvt.s32.f32 %v132
        %s134 = smul.u32 %s20, 128
        %s135 = sld [smem:[#allocation2 + %s134]]
        %s136 = sadd.s32 %s134, 1
        %s137 = sld [smem:[#allocation2 + %s136]]
        %s138 = smax.f32 %s135, %s137
        %p139 = scmp.lt.f32.partialorder %s138, 0.0
        %s140 = scalar_select %p139, 0.0, 0.4
        %s141 = scalar_select %p139, 4000000.0, 0.0
        %v142 = vstv %s135
        %v143 = vsub.f32 %v129, %v142
        %v144 = vsub.f32 %v130, %v142
        %v145 = vstv %s140
        %v146 = vmul.f32 %v143, %v145
        %v147 = vmul.f32 %v144, %v145
        %v148 = vstv %s137
        %v149 = vsub.f32 %v133, %v148
        %v150 = vmul.f32 %v149, %v145
        %v151 = vmul.f32 %v146, %v146
        %v152 = vmul.f32 %v147, %v147
        %v153 = vmul.f32 %v150, %v150
        %v154 = vstv %s141
        %v155 = vadd.f32 %v153, %v154
        %v156 = vadd.f32 %v151, %v155
        %v157 = vadd.f32 %v152, %v155
        %s158 = sadd.s32 %s134, 2
        %s159 = sld [smem:[#allocation2 + %s158]]
        %s160 = sadd.s32 %s134, 3
        %s161 = sld [smem:[#allocation2 + %s160]]
        %s162 = smax.f32 %s159, %s161
        %p163 = scmp.lt.f32.partialorder %s162, 0.0
        %s164 = scalar_select %p163, 0.0, 0.4
        %s165 = scalar_select %p163, 4000000.0, 0.0
        %v166 = vstv %s159
        %v167 = vsub.f32 %v129, %v166
        %v168 = vsub.f32 %v130, %v166
        %v169 = vstv %s164
        %v170 = vmul.f32 %v167, %v169
        %v171 = vmul.f32 %v168, %v169
        %v172 = vstv %s161
        %v173 = vsub.f32 %v133, %v172
        %v174 = vmul.f32 %v173, %v169
        %v175 = vmul.f32 %v170, %v170
        %v176 = vmul.f32 %v171, %v171
        %v177 = vmul.f32 %v174, %v174
        %v178 = vstv %s165
        %v179 = vadd.f32 %v177, %v178
        %v180 = vadd.f32 %v175, %v179
        %v181 = vadd.f32 %v176, %v179
        %v182 = vmin.f32 %v156, %v180
        %v183 = vmin.f32 %v157, %v181
        %v184 = vrsqrt.pop %v182
        %v185 = vmul.f32 %v182, %v184
        %vm186 = vcmp.eq.f32.partialorder %v182, inf
        %v187 = vsel %vm186, %v182, %v185
        %vm188 = vcmp.eq.f32.partialorder %v182, 0.0
        %v189 = vand.u32 %v182, 2147483648
        %v190 = vsel %vm188, %v189, %v187
        %v191 = vrsqrt.pop %v183
        %v192 = vmul.f32 %v183, %v191
        %vm193 = vcmp.eq.f32.partialorder %v183, inf
        %v194 = vsel %vm193, %v183, %v192
        %vm195 = vcmp.eq.f32.partialorder %v183, 0.0
        %v196 = vand.u32 %v183, 2147483648
        %v197 = vsel %vm195, %v196, %v194
        %v198 = vtanh.pop %v190
        %v199 = vtanh.pop %v197
        %vm200 = vcmask 130048
        %201 = vst.msk [vmem:[%s120] sm:$0xff] %vm200, %v198
        %202 = vst.msk [vmem:[%s120 + $0x8] sm:$0xff] %vm200, %v199
        %s203 = sadd.s32 %s134, 4
        %s204 = sld [smem:[#allocation2 + %s203]]
        %s205 = sadd.s32 %s134, 5
        %s206 = sld [smem:[#allocation2 + %s205]]
        %s207 = smax.f32 %s204, %s206
        %p208 = scmp.lt.f32.partialorder %s207, 0.0
        %s209 = scalar_select %p208, 0.0, 0.4
        %s210 = scalar_select %p208, 4000000.0, 0.0
        %v211 = vstv %s204
        %v212 = vsub.f32 %v129, %v211
        %v213 = vsub.f32 %v130, %v211
        %v214 = vstv %s209
        %v215 = vmul.f32 %v212, %v214
        %v216 = vmul.f32 %v213, %v214
        %v217 = vstv %s206
        %v218 = vsub.f32 %v133, %v217
        %v219 = vmul.f32 %v218, %v214
        %v220 = vmul.f32 %v215, %v215
        %v221 = vmul.f32 %v216, %v216
        %v222 = vmul.f32 %v219, %v219
        %v223 = vstv %s210
        %v224 = vadd.f32 %v222, %v223
        %v225 = vadd.f32 %v220, %v224
        %v226 = vadd.f32 %v221, %v224
        %s227 = sadd.s32 %s134, 6
        %s228 = sld [smem:[#allocation2 + %s227]]
        %s229 = sadd.s32 %s134, 7
        %s230 = sld [smem:[#allocation2 + %s229]]
        %s231 = smax.f32 %s228, %s230
        %p232 = scmp.lt.f32.partialorder %s231, 0.0
        %s233 = scalar_select %p232, 0.0, 0.4
        %s234 = scalar_select %p232, 4000000.0, 0.0
        %v235 = vstv %s228
        %v236 = vsub.f32 %v129, %v235
        %v237 = vsub.f32 %v130, %v235
        %v238 = vstv %s233
        %v239 = vmul.f32 %v236, %v238
        %v240 = vmul.f32 %v237, %v238
        %v241 = vstv %s230
        %v242 = vsub.f32 %v133, %v241
        %v243 = vmul.f32 %v242, %v238
        %v244 = vmul.f32 %v239, %v239
        %v245 = vmul.f32 %v240, %v240
        %v246 = vmul.f32 %v243, %v243
        %v247 = vstv %s234
        %v248 = vadd.f32 %v246, %v247
        %v249 = vadd.f32 %v244, %v248
        %v250 = vadd.f32 %v245, %v248
        %v251 = vmin.f32 %v225, %v249
        %v252 = vmin.f32 %v226, %v250
        %v253 = vrsqrt.pop %v251
        %v254 = vmul.f32 %v251, %v253
        %vm255 = vcmp.eq.f32.partialorder %v251, inf
        %v256 = vsel %vm255, %v251, %v254
        %vm257 = vcmp.eq.f32.partialorder %v251, 0.0
        %v258 = vand.u32 %v251, 2147483648
        %v259 = vsel %vm257, %v258, %v256
        %v260 = vrsqrt.pop %v252
        %v261 = vmul.f32 %v252, %v260
        %vm262 = vcmp.eq.f32.partialorder %v252, inf
        %v263 = vsel %vm262, %v252, %v261
        %vm264 = vcmp.eq.f32.partialorder %v252, 0.0
        %v265 = vand.u32 %v252, 2147483648
        %v266 = vsel %vm264, %v265, %v263
        %v267 = vtanh.pop %v259
        %v268 = vtanh.pop %v266
        %s269 = scalar_lea.vmem %s120, 16 [#allocation5]
        %270 = vst.msk [vmem:[%s269] sm:$0xff] %vm200, %v267
        %271 = vst.msk [vmem:[%s269 + $0x8] sm:$0xff] %vm200, %v268
        %s272 = sadd.s32 %s134, 8
        %s273 = sld [smem:[#allocation2 + %s272]]
        %s274 = sadd.s32 %s134, 9
        %s275 = sld [smem:[#allocation2 + %s274]]
        %s276 = smax.f32 %s273, %s275
        %p277 = scmp.lt.f32.partialorder %s276, 0.0
        %s278 = scalar_select %p277, 0.0, 0.4
        %s279 = scalar_select %p277, 4000000.0, 0.0
        %v280 = vstv %s273
        %v281 = vsub.f32 %v129, %v280
        %v282 = vsub.f32 %v130, %v280
        %v283 = vstv %s278
        %v284 = vmul.f32 %v281, %v283
        %v285 = vmul.f32 %v282, %v283
        %v286 = vstv %s275
        %v287 = vsub.f32 %v133, %v286
        %v288 = vmul.f32 %v287, %v283
        %v289 = vmul.f32 %v284, %v284
        %v290 = vmul.f32 %v285, %v285
        %v291 = vmul.f32 %v288, %v288
        %v292 = vstv %s279
        %v293 = vadd.f32 %v291, %v292
        %v294 = vadd.f32 %v289, %v293
        %v295 = vadd.f32 %v290, %v293
        %s296 = sadd.s32 %s134, 10
        %s297 = sld [smem:[#allocation2 + %s296]]
        %s298 = sadd.s32 %s134, 11
        %s299 = sld [smem:[#allocation2 + %s298]]
        %s300 = smax.f32 %s297, %s299
        %p301 = scmp.lt.f32.partialorder %s300, 0.0
        %s302 = scalar_select %p301, 0.0, 0.4
        %s303 = scalar_select %p301, 4000000.0, 0.0
        %v304 = vstv %s297
        %v305 = vsub.f32 %v129, %v304
        %v306 = vsub.f32 %v130, %v304
        %v307 = vstv %s302
        %v308 = vmul.f32 %v305, %v307
        %v309 = vmul.f32 %v306, %v307
        %v310 = vstv %s299
        %v311 = vsub.f32 %v133, %v310
        %v312 = vmul.f32 %v311, %v307
        %v313 = vmul.f32 %v308, %v308
        %v314 = vmul.f32 %v309, %v309
        %v315 = vmul.f32 %v312, %v312
        %v316 = vstv %s303
        %v317 = vadd.f32 %v315, %v316
        %v318 = vadd.f32 %v313, %v317
        %v319 = vadd.f32 %v314, %v317
        %v320 = vmin.f32 %v294, %v318
        %v321 = vmin.f32 %v295, %v319
        %v322 = vrsqrt.pop %v320
        %v323 = vmul.f32 %v320, %v322
        %vm324 = vcmp.eq.f32.partialorder %v320, inf
        %v325 = vsel %vm324, %v320, %v323
        %vm326 = vcmp.eq.f32.partialorder %v320, 0.0
        %v327 = vand.u32 %v320, 2147483648
        %v328 = vsel %vm326, %v327, %v325
        %v329 = vrsqrt.pop %v321
        %v330 = vmul.f32 %v321, %v329
        %vm331 = vcmp.eq.f32.partialorder %v321, inf
        %v332 = vsel %vm331, %v321, %v330
        %vm333 = vcmp.eq.f32.partialorder %v321, 0.0
        %v334 = vand.u32 %v321, 2147483648
        %v335 = vsel %vm333, %v334, %v332
        %v336 = vtanh.pop %v328
        %v337 = vtanh.pop %v335
        %s338 = scalar_lea.vmem %s120, 32 [#allocation5]
        %339 = vst.msk [vmem:[%s338] sm:$0xff] %vm200, %v336
        %340 = vst.msk [vmem:[%s338 + $0x8] sm:$0xff] %vm200, %v337
        %s341 = sand.u32 %s59, 1
        %s342 = scalar_lea.sflag [#allocation3], %s341
        %s343 = sand.u32 %s59, 1
        %s344 = smul.addr %s343, 48
        %s345 = scalar_lea.vmem [#allocation5], %s344
        // Predicated region
        $region29: #{tpu_custom_call.1} parent=23 // pred_check
          %p346 = pneg %p69
        $region30: #{tpu_custom_call.1} parent=23 // pred_check_branch
          %348 = sbr.rel (%p346) target = $region32
        $region31: #{tpu_custom_call.1} parent=23 // pred_region
          %s349 = smul.u32 2, %s21
          %s351 = ssub.s32 768, 768
          %352 = vsyncadd %s342, %s351
          %s353 = smul.addr %s20, 6
          %s354 = sadd.s32 %s349, %s353
          %s355 = smul.addr %s354, 128
          %s356 = scalar_lea.hbm %s1, %s355
          %s357 = sshll.u32 %s345, 4
          %s358 = int_to_ptr.vmem [resolvable:$true] %s357
          %363 = dma.vmem_to_hbm [thread:$0]  %s358, 768, %s356, %s342, 128, 128, 8
        $region32: #{tpu_custom_call.1} parent=23 // pred_fallthru
          _
      $region24: #{tpu_custom_call.1} parent=5 // pred_fallthru
        _
      %p364 = scmp.le.s32.totalorder 2, %s11
      // Predicated region
      $region33: #{tpu_custom_call.1} parent=5 // pred_check
        %p365 = pneg %p364
      $region34: #{tpu_custom_call.1} parent=5 // pred_check_branch
        %367 = sbr.rel (%p365) target = $region36
      $region35: #{tpu_custom_call.1} parent=5 // pred_region
        %s368 = ssub.s32 %s11, 2
        // Predicated region
        $region37: #{tpu_custom_call.1} parent=35 // pred_check
          %p369 = pneg %p75
        $region38: #{tpu_custom_call.1} parent=35 // pred_check_branch
          %371 = sbr.rel (%p369) target = $region40
        $region39: #{tpu_custom_call.1} parent=35 // pred_region
          %s372 = sand.u32 %s60, 1
          %s373 = scalar_lea.sflag [#allocation3], %s372
          %s374 = sand.u32 %s60, 1
          %s375 = smul.addr %s374, 48
          %s376 = scalar_lea.vmem [#allocation5], %s375
          %377 = dma.done %s373, 768
        $region40: #{tpu_custom_call.1} parent=35 // pred_fallthru
          _
      $region36: #{tpu_custom_call.1} parent=5 // pred_fallthru
        _
    $region6: #{tpu_custom_call.1} parent=1 // loop_footer
      %s15 = sadd.s32 1, %s11
    $region7: #{tpu_custom_call.1} parent=1 // loop_footer_branch
      %10 = sbr.rel target = $region3
    $region8: #{tpu_custom_call.1} parent=1 // loop_exit
      _
    %378 = vsyncpa [#allocation3], 1
    %s379 = scalar_lea.sflag [#allocation3], 1
    %380 = vsyncpa %s379, 1
    %381 = vsyncpa [#allocation4], 1
    %s382 = scalar_lea.sflag [#allocation4], 1
    %383 = vsyncpa %s382, 1

</llo_original>
